<compile_context>
chip_gen: v5e
topology: v5e:2x2
jax: 0.10.0
libtpu: 0.0.40
codegen_flags: <defaults>
</compile_context>

<pallas_src>
import functools

import numpy as np

import jax
import jax.numpy as jnp
from jax.experimental import pallas as pl
from jax.experimental.pallas import tpu as pltpu


def _round_up(x, m):
    return (int(x) + int(m) - 1) // int(m) * int(m)


def _sublane_tile(dtype):
    """Sublane tile of a dtype: 8 for 4-byte, 16 for 2-byte, 32 for 1-byte."""
    return max(8, 32 // jnp.dtype(dtype).itemsize)


def _tpu_vmem_and_cores():
    """(VMEM capacity bytes, # TensorCores per device), with safe fallbacks."""
    vmem = 64 * 1024 * 1024          # conservative (v7x-sized) fallback
    cores = 1
    try:
        info = pltpu.get_tpu_info()
        vmem = int(getattr(info, "vmem_capacity_bytes", vmem))
    except Exception:
        pass
    try:
        cores = max(1, int(getattr(jax.devices()[0], "num_cores", 1)))
    except Exception:
        pass
    return vmem, cores


def _pick_block_channels(nc, per_channel_bytes, resident_bytes, work_budget,
                         cores, sublane_multiple=1):
    """Channels per grid step: as many as fit the padding-aware VMEM budget."""
    avail = max(work_budget - resident_bytes, per_channel_bytes)
    bc = max(1, min(nc, int(avail // max(1, per_channel_bytes))))
    # Keep >= `cores` grid steps only on multi-TensorCore parts (v7x megacore);
    # on single-core v5e/v6e a split just shrinks DMA tiles for no gain.
    if cores >= 2 and bc >= nc and nc >= 2 * sublane_multiple:
        bc = int(pl.cdiv(nc, cores))
    if sublane_multiple > 1 and bc < nc:
        bc = max(sublane_multiple, (bc // sublane_multiple) * sublane_multiple)
        bc = min(bc, nc)
    return max(1, int(bc))


# --------------------------------------------------------------------------
# Kernels
# --------------------------------------------------------------------------
def _kron_pool_kernel(m_ref, x_ref, o_ref, *, post_scale):
    """Whole pool as one lane-dense MXU matmul: (Bc, HW) @ (HW, HoWo)."""
    x = x_ref[...].astype(m_ref.dtype)
    acc = jnp.dot(x, m_ref[...], preferred_element_type=jnp.float32)
    if post_scale != 1.0:            # static branch (bf16 path: M is exact 0/1)
        acc = acc * post_scale
    o_ref[...] = acc.astype(o_ref.dtype)


def _separable_pool_kernel(b_ref, at_ref, x_ref, o_ref, *, wout):
    """Separable band-matmul pool on a (Bc, Hp, W) channel tile.

    b_ref : (W, Wout_p)   column band matrix, 0/1, input compute dtype.
    at_ref: (Hp, Hout)    transposed row band matrix, f32, 1/(k1*k2) folded in,
                          zero rows for the zero-padded H rows.
    x_ref : (Bc, Hp, W)   input tile (H zero-padded to the sublane tile).
    o_ref : (Bc, Hout, Wout) output tile.
    """
    x = x_ref[...].astype(b_ref.dtype)
    bc, hp, w = x.shape
    wout_p = b_ref.shape[1]
    hout = at_ref.shape[1]

    # 1) Column window sums: one big-M 2-D MXU matmul (layout-free reshape,
    #    Hp is a multiple of the input sublane tile).  Result stays f32.
    col = jnp.dot(x.reshape(bc * hp, w), b_ref[...],
                  preferred_element_type=jnp.float32)         # (Bc*Hp, Wout_p)

    # 2) Row window sums: per-image minor-dims transpose (XLU) + a second
    #    big-M matmul -- no broadcast copies of A, no tiny batched matmuls.
    colt = jnp.swapaxes(col.reshape(bc, hp, wout_p), 1, 2)    # (Bc, Wout_p, Hp)
    win = jnp.dot(colt.reshape(bc * wout_p, hp), at_ref[...],
                  preferred_element_type=jnp.float32)         # (Bc*Wout_p, Hout)
    out = jnp.swapaxes(win.reshape(bc, wout_p, hout), 1, 2)   # (Bc, Hout, Wout_p)

    o_ref[...] = out[:, :, :wout].astype(o_ref.dtype)


# --------------------------------------------------------------------------
# Wrapper
# --------------------------------------------------------------------------
def avg_pool2d(x, kernel_size, auto_pad=True, block_channels=None):
    """Pallas implementation of AvgPool2d.forward (fast_imp=False path)."""
    N, C, H, W = x.shape
    NC = N * C
    ks1, ks2 = int(kernel_size[0]), int(kernel_size[1])

    global_pool = (ks1 >= H) and (ks2 >= W)          # torch early-return branch
    k1, k2 = min(H, ks1), min(W, ks2)
    Ho, Wo = H - k1 + 1, W - k2 + 1

    # Fuse the replicate auto_pad into the band matrices: padded output row oi
    # reads the valid window starting at clip(oi - pad_top, 0, Ho-1), etc.
    pad_to_input = auto_pad and not global_pool
    if pad_to_input:
        pad_top, pad_left = (H - Ho) // 2, (W - Wo) // 2
        row_start = np.clip(np.arange(H) - pad_top, 0, Ho - 1)
        col_start = np.clip(np.arange(W) - pad_left, 0, Wo - 1)
        Hout, Wout = H, W
    else:
        row_start = np.arange(Ho)
        col_start = np.arange(Wo)
        Hout, Wout = Ho, Wo

    inv_area = 1.0 / float(k1 * k2)
    r = np.arange(H)[None, :]
    A = ((r >= row_start[:, None]) &
         (r < row_start[:, None] + k1)).astype(np.float32)    # (Hout, H)
    c = np.arange(W)[:, None]
    B = ((c >= col_start[None, :]) &
         (c < col_start[None, :] + k2)).astype(np.float32)    # (W, Wout)

    itemsize = x.dtype.itemsize
    compute_dtype = jnp.bfloat16 if x.dtype == jnp.bfloat16 else jnp.float32
    c_itemsize = jnp.dtype(compute_dtype).itemsize

    vmem_cap, cores = _tpu_vmem_and_cores()
    budget = min(96 << 20, max(16 << 20, vmem_cap // 2))   # generation-aware
    work_budget = int(budget * 0.75)                       # compiler headroom
    cparams = pltpu.CompilerParams(dimension_semantics=("parallel",),
                                   vmem_limit_bytes=int(budget))

    xs = x.reshape(NC, H, W)                               # free metadata reshape
    use_kron = (H * W <= 512) and (Hout * Wout <= 512)

    if use_kron:
        # ---- fused single-matmul (lane-dense) path -------------------------
        HW, HoWo = H * W, Hout * Wout
        # M[h*W+w, o*Wout+j] = A[o,h] * B[w,j]   (separable band product)
        M = np.einsum("oh,wj->hwoj", A, B).reshape(HW, HoWo)
        if compute_dtype == jnp.float32:
            M = M * inv_area            # fold the scale once (f32: ~exact)
            post_scale = 1.0
        else:
            post_scale = inv_area       # keep M exact 0/1 in bf16; scale in f32
        M = jnp.asarray(M, dtype=compute_dtype)

        hw_l = _round_up(HW, 128)
        howo_l = _round_up(HoWo, 128)
        per_ch = (2 * hw_l * itemsize            # double-buffered input rows
                  + 2 * howo_l * itemsize        # double-buffered output rows
                  + howo_l * 4)                  # f32 matmul result
        resident = 2 * _round_up(HW, _sublane_tile(compute_dtype)) * howo_l * c_itemsize

        bc = (int(block_channels) if block_channels else
              _pick_block_channels(NC, per_ch, resident, work_budget, cores,
                                   sublane_multiple=8))
        bc = max(1, min(bc, NC))
        if bc < NC and bc % 8 != 0:              # (8,128) rule on the (bc, HW) block
            bc = min(NC, max(8, (bc // 8) * 8)) if NC >= 8 else NC
        grid = (pl.cdiv(NC, bc),)

        cost = pl.CostEstimate(
            flops=int(2 * NC * HW * HoWo), transcendentals=0,
            bytes_accessed=int(NC * (HW + HoWo) * itemsize + M.size * c_itemsize))

        out = pl.pallas_call(
            functools.partial(_kron_pool_kernel, post_scale=post_scale),
            out_shape=jax.ShapeDtypeStruct((NC, HoWo), x.dtype),
            grid=grid,
            in_specs=[
                pl.BlockSpec((HW, HoWo), lambda b: (0, 0)),    # M: VMEM-resident
                pl.BlockSpec((bc, HW), lambda b: (b, 0)),      # flattened images
            ],
            out_specs=pl.BlockSpec((bc, HoWo), lambda b: (b, 0)),
            compiler_params=cparams,
            cost_estimate=cost,
        )(M, xs.reshape(NC, HW))
        return out.reshape(N, C, Hout, Wout)

    # ---- separable two-matmul path ------------------------------------------
    sub_in = _sublane_tile(x.dtype)
    Hp = _round_up(H, sub_in)
    if Hp != H:
        xs = jnp.pad(xs, ((0, 0), (0, Hp - H), (0, 0)))    # zero rows; exact
    Wout_p = _round_up(Wout, 8)

    Bp = np.zeros((W, Wout_p), np.float32)
    Bp[:, :Wout] = B                                       # zero padded columns
    At = np.zeros((Hp, Hout), np.float32)
    At[:H, :] = A.T * inv_area                             # zero padded rows
    Bp = jnp.asarray(Bp, dtype=compute_dtype)              # 0/1: exact in bf16
    At = jnp.asarray(At, dtype=jnp.float32)                # scale folded, f32

    w_l = _round_up(W, 128)
    wp_l = _round_up(Wout_p, 128)
    wo_l = _round_up(Wout, 128)
    ho_l = _round_up(Hout, 128)
    per_ch = (2 * Hp * w_l * itemsize                               # input tile x2
              + 2 * _round_up(Hout, _sublane_tile(x.dtype)) * wo_l * itemsize  # out x2
              + _round_up(Hp, 8) * wp_l * 4                         # col
              + _round_up(Wout_p, 8) * _round_up(Hp, 128) * 4       # col^T
              + _round_up(Wout_p, 8) * ho_l * 4                     # win
              + _round_up(Hout, 8) * wp_l * 4)                      # out (f32)
    resident = 2 * (_round_up(W, _sublane_tile(compute_dtype)) * wp_l * c_itemsize
                    + Hp * ho_l * 4)

    bc = (int(block_channels) if block_channels else
          _pick_block_channels(NC, per_ch, resident, work_budget, cores))
    bc = max(1, min(bc, NC))
    grid = (pl.cdiv(NC, bc),)

    cost = pl.CostEstimate(
        flops=int(2 * NC * (Hp * W * Wout_p + Wout_p * Hp * Hout)),
        transcendentals=0,
        bytes_accessed=int(NC * (Hp * W + Hout * Wout) * itemsize
                           + Bp.size * c_itemsize + At.size * 4))

    out = pl.pallas_call(
        functools.partial(_separable_pool_kernel, wout=Wout),
        out_shape=jax.ShapeDtypeStruct((NC, Hout, Wout), x.dtype),
        grid=grid,
        in_specs=[
            pl.BlockSpec((W, Wout_p), lambda b: (0, 0)),       # B  : VMEM-resident
            pl.BlockSpec((Hp, Hout), lambda b: (0, 0)),        # A^T: VMEM-resident
            pl.BlockSpec((bc, Hp, W), lambda b: (b, 0, 0)),    # channel tile
        ],
        out_specs=pl.BlockSpec((bc, Hout, Wout), lambda b: (b, 0, 0)),
        compiler_params=cparams,
        cost_estimate=cost,
    )(Bp, At, xs)
    return out.reshape(N, C, Hout, Wout)


# --------------------------------------------------------------------------
# Pure-JAX reference (mirrors the PyTorch cumsum formulation)
# --------------------------------------------------------------------------
def _avg_pool2d_ref(x, kernel_size, auto_pad=True):
    N, C, H, W = x.shape
    ks1, ks2 = int(kernel_size[0]), int(kernel_size[1])
    if ks1 >= H and ks2 >= W:
        return jnp.mean(x, axis=(2, 3), keepdims=True)
    k1, k2 = min(H, ks1), min(W, ks2)
    s = jnp.cumsum(jnp.cumsum(x, axis=-1), axis=-2)
    s = jnp.pad(s, ((0, 0), (0, 0), (1, 0), (1, 0)))
    s1 = s[:, :, :-k1, :-k2]
    s2 = s[:, :, :-k1, k2:]
    s3 = s[:, :, k1:, :-k2]
    s4 = s[:, :, k1:, k2:]
    out = (s4 + s1 - s2 - s3) / (k1 * k2)
    if auto_pad:
        Ho, Wo = out.shape[2], out.shape[3]
        ph, pw = H - Ho, W - Wo
        out = jnp.pad(
            out,
            ((0, 0), (0, 0), (ph // 2, (ph + 1) // 2), (pw // 2, (pw + 1) // 2)),
            mode="edge",
        )
    return out


if __name__ == "__main__":
    # AvgPool2d has no learned parameters; configuration chosen as
    # kernel_size=(4, 4), auto_pad=True, fast_imp=False.
    key = jax.random.PRNGKey(0)
    x = jax.random.normal(key, (2, 4, 16, 16), dtype=jnp.float32)
    kernel_size = (4, 4)

    # f32, kron (lane-dense single-matmul) path.
    out = jax.block_until_ready(avg_pool2d(x, kernel_size, auto_pad=True))
    ref = _avg_pool2d_ref(x, kernel_size, auto_pad=True)
    assert out.shape == ref.shape == (2, 4, 16, 16)
    assert jnp.max(jnp.abs(out - ref)) < 1e-4

    # bf16, kron path (bf16 MXU inputs, f32 accumulate + f32 scale).
    xb = x.astype(jnp.bfloat16)
    outb = jax.block_until_ready(avg_pool2d(xb, kernel_size, auto_pad=True))
    assert outb.shape == (2, 4, 16, 16)
    assert jnp.max(jnp.abs(outb.astype(jnp.float32) - ref)) < 5e-2

    # f32, separable path (H*W > 512), auto_pad=True.
    x2 = jax.random.normal(jax.random.PRNGKey(1), (2, 4, 32, 32), dtype=jnp.float32)
    out2 = jax.block_until_ready(avg_pool2d(x2, (5, 5), auto_pad=True))
    ref2 = _avg_pool2d_ref(x2, (5, 5), auto_pad=True)
    assert out2.shape == ref2.shape == (2, 4, 32, 32)
    assert jnp.max(jnp.abs(out2 - ref2)) < 1e-4

    # f32, separable path, auto_pad=False (exercises the Wout->Wout_p padding).
    out3 = jax.block_until_ready(avg_pool2d(x2, (5, 5), auto_pad=False))
    ref3 = _avg_pool2d_ref(x2, (5, 5), auto_pad=False)
    assert out3.shape == ref3.shape == (2, 4, 28, 28)
    assert jnp.max(jnp.abs(out3 - ref3)) < 1e-4

    # bf16, separable path with H not a multiple of the bf16 sublane tile
    # (exercises the wrapper-side zero padding of H + zero rows in A^T).
    x3 = jax.random.normal(jax.random.PRNGKey(2), (1, 2, 24, 40), dtype=jnp.bfloat16)
    out4 = jax.block_until_ready(avg_pool2d(x3, (3, 7), auto_pad=True))
    ref4 = _avg_pool2d_ref(x3.astype(jnp.float32), (3, 7), auto_pad=True)
    assert out4.shape == ref4.shape == (1, 2, 24, 40)
    assert jnp.max(jnp.abs(out4.astype(jnp.float32) - ref4)) < 5e-2

    print("KERNEL_OK")
</pallas_src>

<mosaic_0001>
module attributes {stable_mosaic.version = 11 : i64} {
  func.func @_kron_pool_kernel(%arg0: i32, %arg1: memref<256x256xf32, #tpu.memory_space<vmem>>, %arg2: memref<8x256xf32, #tpu.memory_space<vmem>>, %arg3: memref<8x256xf32, #tpu.memory_space<vmem>>) attributes {dimension_semantics = [#tpu.dimension_semantics<parallel>], iteration_bounds = array<i64: 1>, scalar_prefetch = 0 : i64, scratch_operands = 0 : i64, tpu.core_type = #tpu.core_type<tc>, window_params = [{pipeline_mode = #tpu.pipeline_mode<synchronous>, transform_indices = @transform_0, window_bounds = array<i64: 256, 256>}, {transform_indices = @transform_1, window_bounds = array<i64: 8, 256>}, {transform_indices = @transform_2, window_bounds = array<i64: 8, 256>}]} {
    %c0 = arith.constant 0 : index
    %c0_0 = arith.constant 0 : index
    %0 = vector.load %arg2[%c0, %c0_0] : memref<8x256xf32, #tpu.memory_space<vmem>>, vector<8x256xf32>
    %c0_1 = arith.constant 0 : index
    %c0_2 = arith.constant 0 : index
    %1 = vector.load %arg1[%c0_1, %c0_2] : memref<256x256xf32, #tpu.memory_space<vmem>>, vector<256x256xf32>
    %cst = arith.constant dense<0.000000e+00> : vector<8x256xf32>
    %2 = tpu.matmul %0, %1, %cst {dimension_numbers = #tpu.dot_dimension_numbers<[1], [0], [0], [1], [0, 0, 1, 1], [], []>} : vector<8x256xf32>, vector<256x256xf32>, vector<8x256xf32> -> vector<8x256xf32>
    %c0_3 = arith.constant 0 : index
    %c0_4 = arith.constant 0 : index
    %3 = vector.load %arg3[%c0_3, %c0_4] : memref<8x256xf32, #tpu.memory_space<vmem>>, vector<8x256xf32>
    tpu.vector_store %arg3[%c0_3, %c0_4], %2 {strides = array<i32>} : memref<8x256xf32, #tpu.memory_space<vmem>>, vector<8x256xf32>,
    return
  }
  func.func @transform_0(%arg0: i32) -> (i32, i32) {
    %c0_i32 = arith.constant 0 : i32
    %c0_i32_0 = arith.constant 0 : i32
    %c0_i32_1 = arith.constant 0 : i32
    return %c0_i32, %c0_i32_0 : i32, i32
  }
  func.func @transform_1(%arg0: i32) -> (i32, i32) {
    %c0_i32 = arith.constant 0 : i32
    %c0_i32_0 = arith.constant 0 : i32
    return %arg0, %c0_i32 : i32, i32
  }
  func.func @transform_2(%arg0: i32) -> (i32, i32) {
    %c0_i32 = arith.constant 0 : i32
    %c0_i32_0 = arith.constant 0 : i32
    return %arg0, %c0_i32 : i32, i32
  }
}

</mosaic_0001>

<llo_original>
// kernel: tpu_custom_call.1
$region0: #{tpu_custom_call.1}
  #allocation0 [shape = 'u32[]', space=smem, size = 0x4, offset = 0x4, fixed_abs, tag = 'smem constant byte address 0x4 - core index']
  #allocation1 [shape = 'u32[72,128]{1,0:T(1,128)}', space=vmem, size = 0x9000, scoped, tag = 'internal scratch']
  %s0 = inlined_call_operand.hbm [shape: f32[256,256], index: 0, kind: input, shape index: {}]
  %s1 = inlined_call_operand.hbm [shape: f32[8,256], index: 1, kind: input, shape index: {}]
  %s2 = inlined_call_operand.hbm [shape: f32[8,256], index: 2, kind: output, shape index: {}]
  %s3 = sld [smem:[#allocation0]]
  $region26: #{tpu_custom_call.1} parent=0
    _
  %s5 = ssub.s32 1, %s3
  %s6 = scalar_select 0, %s5, %s3
  $region1: #{tpu_custom_call.1} parent=0
    #allocation2 [shape = 'u8[262144]{0}', space=vmem, size = 0x40000, scoped, tag = 'input window, operand 0, single buffered']
    #allocation3 [shape = 's32[1]{0}', space=sflag, size = 0x4, scoped, tag = 'scoped memory for tpu_custom_call.1']
    #allocation4 [shape = 's32[1]{0}', space=sflag, size = 0x4, scoped, tag = 'scoped memory for tpu_custom_call.1']
    #allocation5 [shape = 'u8[8192]{0}', space=vmem, size = 0x2000, scoped, tag = 'input window, operand 1, single buffered']
    #allocation6 [shape = 's32[1]{0}', space=sflag, size = 0x4, scoped, tag = 'scoped memory for tpu_custom_call.1']
    #allocation7 [shape = 'u8[8192]{0}', space=vmem, size = 0x2000, scoped, tag = 'output window, operand 0, single buffered']
    %7 = vsyncpa [#allocation3], 0
    %8 = vsyncpa [#allocation6], 0
    %9 = vsyncpa [#allocation4], 0
    // Predicated region
    $region2: #{tpu_custom_call.1} parent=1 // pred_check
      _
    $region3: #{tpu_custom_call.1} parent=1 // pred_check_branch
      %11 = sbr.rel (0) target = $region5
    $region4: #{tpu_custom_call.1} parent=1 // pred_region
      %13 = vsyncadd [#allocation3], 0
      %s14 = sshll.u32 %s0, 4
      %s15 = int_to_ptr.hbm [resolvable:$true] %s14
      %s16 = sshll.u32 [#allocation2], 4
      %s17 = int_to_ptr.vmem [resolvable:$true] %s16
      %22 = dma.hbm_to_vmem [thread:$0]  %s15, 8192, %s17, [#allocation3], 256, 256, 16
    $region5: #{tpu_custom_call.1} parent=1 // pred_fallthru
      _
    // Predicated region
    $region6: #{tpu_custom_call.1} parent=1 // pred_check
      _
    $region7: #{tpu_custom_call.1} parent=1 // pred_check_branch
      %24 = sbr.rel (0) target = $region9
    $region8: #{tpu_custom_call.1} parent=1 // pred_region
      %26 = vsyncadd [#allocation6], 0
      %s28 = sshll.u32 %s1, 4
      %s29 = int_to_ptr.hbm [resolvable:$true] %s28
      %s30 = sshll.u32 [#allocation5], 4
      %s31 = int_to_ptr.vmem [resolvable:$true] %s30
      %33 = dma.hbm_to_vmem [thread:$0]  %s29, 256, %s31, [#allocation6]
    $region9: #{tpu_custom_call.1} parent=1 // pred_fallthru
      _
    // Predicated region
    $region10: #{tpu_custom_call.1} parent=1 // pred_check
      _
    $region11: #{tpu_custom_call.1} parent=1 // pred_check_branch
      %35 = sbr.rel (0) target = $region13
    $region12: #{tpu_custom_call.1} parent=1 // pred_region
      %37 = dma.done [#allocation3], 8192
    $region13: #{tpu_custom_call.1} parent=1 // pred_fallthru
      _
    // Predicated region
    $region14: #{tpu_custom_call.1} parent=1 // pred_check
      _
    $region15: #{tpu_custom_call.1} parent=1 // pred_check_branch
      %39 = sbr.rel (0) target = $region17
    $region16: #{tpu_custom_call.1} parent=1 // pred_region
      %41 = dma.done [#allocation6], 256
    $region17: #{tpu_custom_call.1} parent=1 // pred_fallthru
      _
    %v42 = vld [vmem:[#allocation5] sm:$0xff]
    %v43 = vld [vmem:[#allocation5 + $0x8] sm:$0xff]
    %v44 = vld [vmem:[#allocation2] sm:$0xff]
    %v45 = vld [vmem:[#allocation2 + $0x8] sm:$0xff]
    %v46 = vld [vmem:[#allocation2 + $0x10] sm:$0xff]
    %v47 = vld [vmem:[#allocation2 + $0x18] sm:$0xff]
    %v48 = vld [vmem:[#allocation2 + $0x20] sm:$0xff]
    %v49 = vld [vmem:[#allocation2 + $0x28] sm:$0xff]
    %v50 = vld [vmem:[#allocation2 + $0x30] sm:$0xff]
    %v51 = vld [vmem:[#allocation2 + $0x38] sm:$0xff]
    %v52 = vld [vmem:[#allocation2 + $0x40] sm:$0xff]
    %v53 = vld [vmem:[#allocation2 + $0x48] sm:$0xff]
    %v54 = vld [vmem:[#allocation2 + $0x50] sm:$0xff]
    %v55 = vld [vmem:[#allocation2 + $0x58] sm:$0xff]
    %v56 = vld [vmem:[#allocation2 + $0x60] sm:$0xff]
    %v57 = vld [vmem:[#allocation2 + $0x68] sm:$0xff]
    %v58 = vld [vmem:[#allocation2 + $0x70] sm:$0xff]
    %v59 = vld [vmem:[#allocation2 + $0x78] sm:$0xff]
    %v60 = vld [vmem:[#allocation2 + $0x80] sm:$0xff]
    %v61 = vld [vmem:[#allocation2 + $0x88] sm:$0xff]
    %v62 = vld [vmem:[#allocation2 + $0x90] sm:$0xff]
    %v63 = vld [vmem:[#allocation2 + $0x98] sm:$0xff]
    %v64 = vld [vmem:[#allocation2 + $0xa0] sm:$0xff]
    %v65 = vld [vmem:[#allocation2 + $0xa8] sm:$0xff]
    %v66 = vld [vmem:[#allocation2 + $0xb0] sm:$0xff]
    %v67 = vld [vmem:[#allocation2 + $0xb8] sm:$0xff]
    %v68 = vld [vmem:[#allocation2 + $0xc0] sm:$0xff]
    %v69 = vld [vmem:[#allocation2 + $0xc8] sm:$0xff]
    %v70 = vld [vmem:[#allocation2 + $0xd0] sm:$0xff]
    %v71 = vld [vmem:[#allocation2 + $0xd8] sm:$0xff]
    %v72 = vld [vmem:[#allocation2 + $0xe0] sm:$0xff]
    %v73 = vld [vmem:[#allocation2 + $0xe8] sm:$0xff]
    %v74 = vld [vmem:[#allocation2 + $0xf0] sm:$0xff]
    %v75 = vld [vmem:[#allocation2 + $0xf8] sm:$0xff]
    %v76 = vld [vmem:[#allocation2 + $0x100] sm:$0xff]
    %v77 = vld [vmem:[#allocation2 + $0x108] sm:$0xff]
    %v78 = vld [vmem:[#allocation2 + $0x110] sm:$0xff]
    %v79 = vld [vmem:[#allocation2 + $0x118] sm:$0xff]
    %v80 = vld [vmem:[#allocation2 + $0x120] sm:$0xff]
    %v81 = vld [vmem:[#allocation2 + $0x128] sm:$0xff]
    %v82 = vld [vmem:[#allocation2 + $0x130] sm:$0xff]
    %v83 = vld [vmem:[#allocation2 + $0x138] sm:$0xff]
    %v84 = vld [vmem:[#allocation2 + $0x140] sm:$0xff]
    %v85 = vld [vmem:[#allocation2 + $0x148] sm:$0xff]
    %v86 = vld [vmem:[#allocation2 + $0x150] sm:$0xff]
    %v87 = vld [vmem:[#allocation2 + $0x158] sm:$0xff]
    %v88 = vld [vmem:[#allocation2 + $0x160] sm:$0xff]
    %v89 = vld [vmem:[#allocation2 + $0x168] sm:$0xff]
    %v90 = vld [vmem:[#allocation2 + $0x170] sm:$0xff]
    %v91 = vld [vmem:[#allocation2 + $0x178] sm:$0xff]
    %v92 = vld [vmem:[#allocation2 + $0x180] sm:$0xff]
    %v93 = vld [vmem:[#allocation2 + $0x188] sm:$0xff]
    %v94 = vld [vmem:[#allocation2 + $0x190] sm:$0xff]
    %v95 = vld [vmem:[#allocation2 + $0x198] sm:$0xff]
    %v96 = vld [vmem:[#allocation2 + $0x1a0] sm:$0xff]
    %v97 = vld [vmem:[#allocation2 + $0x1a8] sm:$0xff]
    %v98 = vld [vmem:[#allocation2 + $0x1b0] sm:$0xff]
    %v99 = vld [vmem:[#allocation2 + $0x1b8] sm:$0xff]
    %v100 = vld [vmem:[#allocation2 + $0x1c0] sm:$0xff]
    %v101 = vld [vmem:[#allocation2 + $0x1c8] sm:$0xff]
    %v102 = vld [vmem:[#allocation2 + $0x1d0] sm:$0xff]
    %v103 = vld [vmem:[#allocation2 + $0x1d8] sm:$0xff]
    %v104 = vld [vmem:[#allocation2 + $0x1e0] sm:$0xff]
    %v105 = vld [vmem:[#allocation2 + $0x1e8] sm:$0xff]
    %v106 = vld [vmem:[#allocation2 + $0x1f0] sm:$0xff]
    %v107 = vld [vmem:[#allocation2 + $0x1f8] sm:$0xff]
    %108 = vmatpush.msra.mxu0 %v74
    %109 = vmatpush.msra.mxu0 %v72
    %110 = vmatpush.msra.mxu0 %v70
    %111 = vmatpush.msra.mxu0 %v68
    %112 = vmatpush.msra.mxu0 %v66
    %113 = vmatpush.msra.mxu0 %v64
    %114 = vmatpush.msra.mxu0 %v62
    %115 = vmatpush.msra.mxu0 %v60
    %116 = vmatpush.msra.mxu0 %v58
    %117 = vmatpush.msra.mxu0 %v56
    %118 = vmatpush.msra.mxu0 %v54
    %119 = vmatpush.msra.mxu0 %v52
    %120 = vmatpush.msra.mxu0 %v50
    %121 = vmatpush.msra.mxu0 %v48
    %122 = vmatpush.msra.mxu0 %v46
    %123 = vmatpush.msra.mxu0 %v44
    %124 = vmatmul.f32.gmra.mxu0 %v42
    %v125 = vpop.f32.mrf.mxu0
    %v126 = vadd.f32 0.0, %v125
    %127 = vdwg.mxu0
    %128 = vmatpush.msra.mxu0 %v106
    %129 = vmatpush.msra.mxu0 %v104
    %130 = vmatpush.msra.mxu0 %v102
    %131 = vmatpush.msra.mxu0 %v100
    %132 = vmatpush.msra.mxu0 %v98
    %133 = vmatpush.msra.mxu0 %v96
    %134 = vmatpush.msra.mxu0 %v94
    %135 = vmatpush.msra.mxu0 %v92
    %136 = vmatpush.msra.mxu0 %v90
    %137 = vmatpush.msra.mxu0 %v88
    %138 = vmatpush.msra.mxu0 %v86
    %139 = vmatpush.msra.mxu0 %v84
    %140 = vmatpush.msra.mxu0 %v82
    %141 = vmatpush.msra.mxu0 %v80
    %142 = vmatpush.msra.mxu0 %v78
    %143 = vmatpush.msra.mxu0 %v76
    %144 = vmatmul.f32.gmra.mxu0 %v43
    %v145 = vpop.f32.mrf.mxu0
    %v146 = vadd.f32 %v126, %v145
    %147 = vdwg.mxu0
    %148 = vmatpush.msra.mxu0 %v75
    %149 = vmatpush.msra.mxu0 %v73
    %150 = vmatpush.msra.mxu0 %v71
    %151 = vmatpush.msra.mxu0 %v69
    %152 = vmatpush.msra.mxu0 %v67
    %153 = vmatpush.msra.mxu0 %v65
    %154 = vmatpush.msra.mxu0 %v63
    %155 = vmatpush.msra.mxu0 %v61
    %156 = vmatpush.msra.mxu0 %v59
    %157 = vmatpush.msra.mxu0 %v57
    %158 = vmatpush.msra.mxu0 %v55
    %159 = vmatpush.msra.mxu0 %v53
    %160 = vmatpush.msra.mxu0 %v51
    %161 = vmatpush.msra.mxu0 %v49
    %162 = vmatpush.msra.mxu0 %v47
    %163 = vmatpush.msra.mxu0 %v45
    %164 = vmatmul.f32.gmra.mxu0 %v42
    %v165 = vpop.f32.mrf.mxu0
    %v166 = vadd.f32 0.0, %v165
    %167 = vdwg.mxu0
    %168 = vmatpush.msra.mxu0 %v107
    %169 = vmatpush.msra.mxu0 %v105
    %170 = vmatpush.msra.mxu0 %v103
    %171 = vmatpush.msra.mxu0 %v101
    %172 = vmatpush.msra.mxu0 %v99
    %173 = vmatpush.msra.mxu0 %v97
    %174 = vmatpush.msra.mxu0 %v95
    %175 = vmatpush.msra.mxu0 %v93
    %176 = vmatpush.msra.mxu0 %v91
    %177 = vmatpush.msra.mxu0 %v89
    %178 = vmatpush.msra.mxu0 %v87
    %179 = vmatpush.msra.mxu0 %v85
    %180 = vmatpush.msra.mxu0 %v83
    %181 = vmatpush.msra.mxu0 %v81
    %182 = vmatpush.msra.mxu0 %v79
    %183 = vmatpush.msra.mxu0 %v77
    %184 = vmatmul.f32.gmra.mxu0 %v43
    %v185 = vpop.f32.mrf.mxu0
    %v186 = vadd.f32 %v166, %v185
    %187 = vdwg.mxu0
    %188 = vst [vmem:[#allocation7] sm:$0xff] %v146
    %189 = vst [vmem:[#allocation7 + $0x8] sm:$0xff] %v186
    // Predicated region
    $region18: #{tpu_custom_call.1} parent=1 // pred_check
      _
    $region19: #{tpu_custom_call.1} parent=1 // pred_check_branch
      %191 = sbr.rel (0) target = $region21
    $region20: #{tpu_custom_call.1} parent=1 // pred_region
      %193 = vsyncadd [#allocation4], 0
      %s195 = sshll.u32 [#allocation7], 4
      %s196 = int_to_ptr.vmem [resolvable:$true] %s195
      %s197 = sshll.u32 %s2, 4
      %s198 = int_to_ptr.hbm [resolvable:$true] %s197
      %200 = dma.vmem_to_hbm [thread:$0]  %s196, 256, %s198, [#allocation4]
    $region21: #{tpu_custom_call.1} parent=1 // pred_fallthru
      _
    // Predicated region
    $region22: #{tpu_custom_call.1} parent=1 // pred_check
      _
    $region23: #{tpu_custom_call.1} parent=1 // pred_check_branch
      %202 = sbr.rel (0) target = $region25
    $region24: #{tpu_custom_call.1} parent=1 // pred_region
      %204 = dma.done [#allocation4], 256
    $region25: #{tpu_custom_call.1} parent=1 // pred_fallthru
      _
    %205 = vsyncpa [#allocation3], 1
    %206 = vsyncpa [#allocation6], 1
    %207 = vsyncpa [#allocation4], 1

</llo_original>
